<compile_context>
chip_gen: v7x
topology: tpu7x:2x2x1
jax: 0.10.0
libtpu: 0.0.40
codegen_flags: <defaults>
</compile_context>

<pallas_src>
import math

import jax
import jax.numpy as jnp
from jax.experimental import pallas as pl
from jax.experimental.pallas import tpu as pltpu


def _cos_times_norm_kernel(xn_ref, xnorm_ref, w_ref, inv_w_ref, o_ref):
    # xn_ref:    (tile_b, D)     pre-normalized input rows (bf16 by default)
    # xnorm_ref: (tile_b, 1)     f32 ||x||_2 per row
    # w_ref:     (tile_n, D)     raw class-weight tile (bf16 stream)
    # inv_w_ref: (1, tile_n)     f32 per-class 1/||w||_2 (precomputed from f32 w)
    # o_ref:     (tile_b, tile_n)
    cos = jax.lax.dot_general(                       # MXU, f32 accumulation,
        xn_ref[...], w_ref[...],                     # no materialized transpose
        dimension_numbers=(((1,), (1,)), ((), ())),
        preferred_element_type=jnp.float32)
    cos = jnp.clip(cos * inv_w_ref[...], -1.0, 1.0)  # column scale == normalize(w)
    o_ref[...] = (cos * xnorm_ref[...]).astype(o_ref.dtype)


_CHEBYSHEV = [
    lambda c: jnp.ones_like(c),
    lambda c: c,
    lambda c: 2.0 * c * c - 1.0,
    lambda c: (4.0 * c * c - 3.0) * c,
    lambda c: (8.0 * c * c - 8.0) * c * c + 1.0,
    lambda c: ((16.0 * c * c - 20.0) * c * c + 5.0) * c,
]


def _auto_tiles(B, N, D, w_itemsize):
    # Batch tile: full batch up to 256 rows (MXU M dim); 256-row blocks beyond.
    tile_b = B if B <= 256 else 256
    # Class tile: ~1 MiB of streamed weight per tile to amortize the ~0.35us/step
    # pipeline overhead, rounded to a lane multiple, but keep >= 2 class-dim grid
    # steps so both v7x TensorCores get work.
    tile_n = max(512, pl.cdiv(1 << 20, w_itemsize * D))
    tile_n = 128 * pl.cdiv(tile_n, 128)
    if 2 * tile_n > N:
        tile_n = max(128, 128 * (N // 256)) if N >= 256 else N
    return tile_b, min(tile_n, N)


def sphereface_forward(x, label, weight, *, m=4, iteration=1, lamb=None,
                       tile_n=None, tile_b=None, mxu_dtype=jnp.bfloat16,
                       out_dtype=jnp.float32):
    """SphereFace forward.  `iteration` (or `lamb`) may be a traced jnp scalar,
    so a jitted caller never re-compiles while lambda anneals each step."""
    if not 0 <= m <= 5:
        raise ValueError("SphereFace margin m must be in [0, 5]")
    B, D = x.shape
    N, D2 = weight.shape
    assert D == D2
    eps = 1e-12

    # ---- annealed lambda: max(5, 1000*(1+0.12*iter)^-1), fully traced --------
    if lamb is None:
        it = jnp.asarray(iteration, jnp.float32)
        lamb = jnp.maximum(5.0, 1000.0 * (1.0 + 0.12 * it) ** (-1.0))
    inv_one_plus_lamb = 1.0 / (1.0 + lamb)

    # ---- hoisted normalizations (computed ONCE, outside the class-tile loop) --
    x32 = x.astype(jnp.float32)
    x_sq = jnp.sum(x32 * x32, axis=-1, keepdims=True)
    x_norm = jnp.sqrt(x_sq)                                   # torch.norm(input, 2, 1)
    xn = x32 * jax.lax.rsqrt(jnp.maximum(x_sq, eps * eps))    # F.normalize(input)
    xn_mxu = xn.astype(mxu_dtype)
    w32 = weight.astype(jnp.float32)
    inv_w = jax.lax.rsqrt(jnp.maximum(jnp.sum(w32 * w32, axis=-1), eps * eps))  # (N,)
    w_mxu = weight.astype(mxu_dtype)                          # bf16 HBM stream

    # ---- tiling ---------------------------------------------------------------
    w_itemsize = jnp.dtype(mxu_dtype).itemsize
    out_itemsize = jnp.dtype(out_dtype).itemsize
    auto_b, auto_n = _auto_tiles(B, N, D, w_itemsize)
    tile_b = auto_b if tile_b is None else min(tile_b, B)
    tile_n = auto_n if tile_n is None else min(tile_n, N)
    if tile_n % 128 != 0 and tile_n != N:
        raise ValueError("tile_n must be a multiple of 128 or equal to out_features")
    if tile_b % 8 != 0 and tile_b != B:
        raise ValueError("tile_b must be a multiple of 8 or equal to the batch size")

    gn, gb = pl.cdiv(N, tile_n), pl.cdiv(B, tile_b)
    N_pad, B_pad = gn * tile_n, gb * tile_b

    # Pad to tile multiples (padded cos is exactly 0: zero rows / inv_w = 0).
    # The weight pad fuses with the bf16 cast above, so it is ~free.
    xn_in, xnorm_in = xn_mxu, x_norm
    w_in, inv_w_in = w_mxu, inv_w.reshape(1, N)
    if B_pad != B:
        xn_in = jnp.pad(xn_in, ((0, B_pad - B), (0, 0)))
        xnorm_in = jnp.pad(xnorm_in, ((0, B_pad - B), (0, 0)))
    if N_pad != N:
        w_in = jnp.pad(w_in, ((0, N_pad - N), (0, 0)))
        inv_w_in = jnp.pad(inv_w, (0, N_pad - N)).reshape(1, N_pad)

    # ---- VMEM budget (double-buffered tiles + f32 temporaries, v7x-safe cap) --
    vmem_bytes = 2 * (tile_n * D * w_itemsize            # weight tile
                      + tile_b * D * w_itemsize          # xn tile
                      + tile_b * 4 + tile_n * 4          # ||x|| / 1/||w|| tiles
                      + tile_b * tile_n * out_itemsize)  # output tile
    vmem_bytes += 2 * tile_b * tile_n * 4                # in-kernel f32 temporaries
    vmem_bytes = int(min(max(2 * vmem_bytes, 16 << 20), 48 << 20))

    cost = pl.CostEstimate(
        flops=int(2 * B_pad * N_pad * D),
        transcendentals=0,
        bytes_accessed=int(N_pad * D * w_itemsize + gn * B_pad * D * w_itemsize
                           + B_pad * N_pad * out_itemsize + B_pad * 4 + N_pad * 4))

    cos_x = pl.pallas_call(
        _cos_times_norm_kernel,
        out_shape=jax.ShapeDtypeStruct((B_pad, N_pad), out_dtype),
        grid_spec=pltpu.PrefetchScalarGridSpec(
            num_scalar_prefetch=0,
            # class tiles outer / batch tiles inner: the weight-tile index is
            # constant across inner steps, so its DMA is not re-issued.
            grid=(gn, gb),
            in_specs=[
                pl.BlockSpec((tile_b, D), lambda j, i: (i, 0)),   # xn (pre-normalized)
                pl.BlockSpec((tile_b, 1), lambda j, i: (i, 0)),   # ||x||
                pl.BlockSpec((tile_n, D), lambda j, i: (j, 0)),   # weight tile (streamed)
                pl.BlockSpec((1, tile_n), lambda j, i: (0, j)),   # 1/||w|| tile
            ],
            out_specs=pl.BlockSpec((tile_b, tile_n), lambda j, i: (i, j)),
        ),
        compiler_params=pltpu.CompilerParams(
            dimension_semantics=("parallel", "parallel"),
            vmem_limit_bytes=vmem_bytes),
        cost_estimate=cost,
    )(xn_in, xnorm_in, w_in, inv_w_in)

    if B_pad != B or N_pad != N:
        cos_x = cos_x[:B, :N]

    # ---- per-row target-column margin (only B entries change) ----------------
    label = label.astype(jnp.int32)
    w_t = jnp.take(w_mxu, label, axis=0).astype(jnp.float32)      # (B, D), bf16-matched
    inv_w_t = jnp.take(inv_w, label)                               # (B,)
    cos_t = jnp.sum(xn_mxu.astype(jnp.float32) * w_t, axis=-1) * inv_w_t
    cos_t = jnp.clip(cos_t, -1.0, 1.0)
    cos_m_t = _CHEBYSHEV[m](cos_t)
    theta = jnp.arccos(cos_t)
    k = jnp.floor(m * theta / 3.14159265)
    sign = jnp.where(jnp.mod(k, 2.0) == 0.0, 1.0, -1.0)            # (-1)^k
    phi_t = sign * cos_m_t - 2.0 * k
    target = (cos_t + (phi_t - cos_t) * inv_one_plus_lamb) * x_norm[:, 0]
    rows = jnp.arange(B)
    # out-of-range labels are dropped by the scatter (== no margin applied).
    return cos_x.at[rows, label].set(target.astype(out_dtype))


def sphereface_reference(x, label, weight, *, m=4, iteration=1,
                         matmul_dtype=jnp.float32):
    """Pure-JAX port of PyTorch SphereFace.forward (device_id=None path).
    matmul_dtype mirrors the kernel's bf16 operands for a tight check."""
    lamb = max(5.0, 1000.0 * (1.0 + 0.12 * iteration) ** (-1.0))
    eps = 1e-12
    x_norm = jnp.linalg.norm(x, axis=-1, keepdims=True)
    xn = x / jnp.maximum(x_norm, eps)
    inv_w = 1.0 / jnp.maximum(jnp.linalg.norm(weight, axis=-1), eps)
    cos = jax.lax.dot_general(
        xn.astype(matmul_dtype), weight.astype(matmul_dtype),
        dimension_numbers=(((1,), (1,)), ((), ())),
        preferred_element_type=jnp.float32,
        precision=jax.lax.Precision.HIGHEST)
    cos = jnp.clip(cos * inv_w[None, :], -1.0, 1.0)
    cos_m = _CHEBYSHEV[m](cos)
    theta = jnp.arccos(cos)
    k = jnp.floor(m * theta / 3.14159265)
    sign = jnp.where(jnp.mod(k, 2.0) == 0.0, 1.0, -1.0)
    phi = sign * cos_m - 2.0 * k
    one_hot = jax.nn.one_hot(label, weight.shape[0], dtype=cos.dtype)
    out = one_hot * (phi - cos) / (1.0 + lamb) + cos
    return out * x_norm


if __name__ == "__main__":
    key = jax.random.PRNGKey(0)
    B, in_features, out_features, m = 8, 64, 256, 4

    kx, kw, kl = jax.random.split(key, 3)
    x = jax.random.normal(kx, (B, in_features), dtype=jnp.float32)
    # xavier_uniform_ on (out_features, in_features): U(-a, a), a = sqrt(6/(fan_in+fan_out))
    bound = math.sqrt(6.0 / (in_features + out_features))
    weight = jax.random.uniform(kw, (out_features, in_features), dtype=jnp.float32,
                                minval=-bound, maxval=bound)
    label = jax.random.randint(kl, (B,), 0, out_features, dtype=jnp.int32)

    # jit once with `iteration` traced: lambda anneals every step with no recompile.
    fwd = jax.jit(lambda x, l, w, it: sphereface_forward(x, l, w, m=m, iteration=it))
    out1 = jax.block_until_ready(fwd(x, label, weight, jnp.float32(1.0)))
    out2 = jax.block_until_ready(fwd(x, label, weight, jnp.float32(2.0)))

    # Single-class-tile path (tile_n == N) and bf16-output path.
    out_single = jax.block_until_ready(
        sphereface_forward(x, label, weight, m=m, iteration=1, tile_n=out_features))
    out_b16 = jax.block_until_ready(
        sphereface_forward(x, label, weight, m=m, iteration=1, out_dtype=jnp.bfloat16))

    ref1_bf16 = sphereface_reference(x, label, weight, m=m, iteration=1,
                                     matmul_dtype=jnp.bfloat16)
    ref1_f32 = sphereface_reference(x, label, weight, m=m, iteration=1,
                                    matmul_dtype=jnp.float32)
    ref2_bf16 = sphereface_reference(x, label, weight, m=m, iteration=2,
                                     matmul_dtype=jnp.bfloat16)

    assert out1.shape == (B, out_features)
    assert jnp.allclose(out1, ref1_bf16, atol=1e-2, rtol=1e-2), \
        "mismatch vs bf16-matched reference (iter=1)"
    assert jnp.allclose(out1, ref1_f32, atol=8e-2, rtol=8e-2), \
        "mismatch vs f32 reference (iter=1)"
    assert jnp.allclose(out2, ref2_bf16, atol=1e-2, rtol=1e-2), \
        "mismatch vs bf16-matched reference (iter=2)"
    assert jnp.allclose(out_single, ref1_bf16, atol=1e-2, rtol=1e-2), \
        "single-tile path mismatch"
    assert jnp.allclose(out_b16.astype(jnp.float32), ref1_bf16, atol=5e-2, rtol=5e-2), \
        "bf16-output path mismatch"

    print("KERNEL_OK")
</pallas_src>

<mosaic_0001>
module attributes {stable_mosaic.version = 11 : i64} {
  func.func @_cos_times_norm_kernel(%arg0: i32, %arg1: i32, %arg2: memref<8x64xbf16, #tpu.memory_space<vmem>>, %arg3: memref<8x1xf32, #tpu.memory_space<vmem>>, %arg4: memref<128x64xbf16, #tpu.memory_space<vmem>>, %arg5: memref<1x128xf32, #tpu.memory_space<vmem>>, %arg6: memref<8x128xf32, #tpu.memory_space<vmem>>) attributes {dimension_semantics = [#tpu.dimension_semantics<parallel>, #tpu.dimension_semantics<parallel>], iteration_bounds = array<i64: 2, 1>, scalar_prefetch = 0 : i64, scratch_operands = 0 : i64, tpu.core_type = #tpu.core_type<tc>, window_params = [{transform_indices = @transform_0, window_bounds = array<i64: 8, 64>}, {transform_indices = @transform_1, window_bounds = array<i64: 8, 1>}, {transform_indices = @transform_2, window_bounds = array<i64: 128, 64>}, {transform_indices = @transform_3, window_bounds = array<i64: 1, 128>}, {transform_indices = @transform_4, window_bounds = array<i64: 8, 128>}]} {
    %c0 = arith.constant 0 : index
    %c0_0 = arith.constant 0 : index
    %0 = vector.load %arg2[%c0, %c0_0] : memref<8x64xbf16, #tpu.memory_space<vmem>>, vector<8x64xbf16>
    %c0_1 = arith.constant 0 : index
    %c0_2 = arith.constant 0 : index
    %1 = vector.load %arg4[%c0_1, %c0_2] : memref<128x64xbf16, #tpu.memory_space<vmem>>, vector<128x64xbf16>
    %cst = arith.constant dense<0.000000e+00> : vector<8x128xf32>
    %2 = tpu.matmul %0, %1, %cst {dimension_numbers = #tpu.dot_dimension_numbers<[1], [1], [0], [0], [0, 0, 1, 0], [], []>} : vector<8x64xbf16>, vector<128x64xbf16>, vector<8x128xf32> -> vector<8x128xf32>
    %c0_3 = arith.constant 0 : index
    %c0_4 = arith.constant 0 : index
    %3 = vector.load %arg5[%c0_3, %c0_4] : memref<1x128xf32, #tpu.memory_space<vmem>>, vector<1x128xf32>
    %4 = vector.broadcast %3 : vector<1x128xf32> to vector<8x128xf32>
    %5 = arith.mulf %2, %4 : vector<8x128xf32>
    %cst_5 = arith.constant -1.000000e+00 : f32
    %cst_6 = arith.constant 1.000000e+00 : f32
    %6 = vector.broadcast %cst_5 : f32 to vector<8x128xf32>
    %7 = arith.maximumf %6, %5 : vector<8x128xf32>
    %8 = vector.broadcast %cst_6 : f32 to vector<8x128xf32>
    %9 = arith.minimumf %8, %7 : vector<8x128xf32>
    %c0_7 = arith.constant 0 : index
    %c0_8 = arith.constant 0 : index
    %10 = vector.load %arg3[%c0_7, %c0_8] : memref<8x1xf32, #tpu.memory_space<vmem>>, vector<8x1xf32>
    %11 = vector.broadcast %10 : vector<8x1xf32> to vector<8x128xf32>
    %12 = arith.mulf %9, %11 : vector<8x128xf32>
    %c0_9 = arith.constant 0 : index
    %c0_10 = arith.constant 0 : index
    %13 = vector.load %arg6[%c0_9, %c0_10] : memref<8x128xf32, #tpu.memory_space<vmem>>, vector<8x128xf32>
    tpu.vector_store %arg6[%c0_9, %c0_10], %12 {strides = array<i32>} : memref<8x128xf32, #tpu.memory_space<vmem>>, vector<8x128xf32>,
    return
  }
  func.func @transform_0(%arg0: i32, %arg1: i32) -> (i32, i32) {
    %c0_i32 = arith.constant 0 : i32
    %c0_i32_0 = arith.constant 0 : i32
    return %arg1, %c0_i32 : i32, i32
  }
  func.func @transform_1(%arg0: i32, %arg1: i32) -> (i32, i32) {
    %c0_i32 = arith.constant 0 : i32
    %c0_i32_0 = arith.constant 0 : i32
    return %arg1, %c0_i32 : i32, i32
  }
  func.func @transform_2(%arg0: i32, %arg1: i32) -> (i32, i32) {
    %c0_i32 = arith.constant 0 : i32
    %c0_i32_0 = arith.constant 0 : i32
    return %arg0, %c0_i32 : i32, i32
  }
  func.func @transform_3(%arg0: i32, %arg1: i32) -> (i32, i32) {
    %c0_i32 = arith.constant 0 : i32
    %c0_i32_0 = arith.constant 0 : i32
    return %c0_i32, %arg0 : i32, i32
  }
  func.func @transform_4(%arg0: i32, %arg1: i32) -> (i32, i32) {
    %c0_i32 = arith.constant 0 : i32
    return %arg1, %arg0 : i32, i32
  }
}

</mosaic_0001>

<llo_original>
// kernel: _lambda_.1
$region0: #{_lambda_.1}
  #allocation0 [shape = 'u32[]', space=smem, size = 0x4, offset = 0x4, fixed_abs, tag = 'smem constant byte address 0x4 - core index']
  #allocation1 [shape = 'u32[144,128]{1,0:T(1,128)}', space=vmem, size = 0x12000, scoped, tag = 'internal scratch']
  %s0 = inlined_call_operand.vmem [shape: bf16[8,64], index: 0, kind: input, shape index: {}]
  %s1 = inlined_call_operand.vmem [shape: f32[8,1], index: 1, kind: input, shape index: {}]
  %s2 = inlined_call_operand.vmem [shape: bf16[256,64], index: 2, kind: input, shape index: {}]
  %s3 = inlined_call_operand.vmem [shape: f32[1,256], index: 3, kind: input, shape index: {}]
  %s4 = inlined_call_operand.hbm [shape: f32[8,256], index: 4, kind: output, shape index: {}]
  %s5 = sld [smem:[#allocation0]]
  $region49: #{_lambda_.1} parent=0
    _
  %s7 = ssub.s32 1, %s5
  %s8 = scalar_select 0, %s7, %s5
  $region1: #{_lambda_.1} parent=0
    #allocation2 [shape = 'u8[8192]{0}', space=vmem, size = 0x2000, scoped, tag = 'output window, operand 0']
    #allocation3 [shape = 's32[2]{0}', space=sflag, size = 0x8, scoped, tag = 'scoped memory for _lambda_.1']
    %9 = vsyncpa [#allocation3], 0
    %s10 = scalar_lea.sflag [#allocation3], 1
    %11 = vsyncpa %s10, 0
    loop: start=0, step=1, limit=4
    $region2: #{_lambda_.1} parent=1 // loop_pre_header
      _
    $region3: #{_lambda_.1} parent=1 // loop_header
      %s13 = sphi 0, %s17
      %p14 = scmp.ge.s32.totalorder %s13, 4
      %s20 = sphi 0, %s32
      %s21 = sphi 0, %s28
      %s22 = sphi 0, %s20
      %s23 = sphi 0, %s21
      %s24 = sphi 0, %s22
      %s25 = sphi 0, %s23
      %s35 = sphi 0, %s37
      %s38 = sphi 0, %s35
      %s39 = sphi 0, %s38
      %s55 = sphi 0, %s39
      %s61 = sphi 0, %s63
      %s64 = sphi 0, %s61
      %s65 = sphi 0, %s64
      %s81 = sphi 0, %s65
      %s87 = sphi 0, %s89
      %s90 = sphi 0, %s87
      %s91 = sphi 0, %s90
      %s107 = sphi 0, %s91
      %s113 = sphi 0, %s115
      %s116 = sphi 0, %s113
      %s117 = sphi 0, %s116
      %s133 = sphi 0, %s117
      %s141 = sphi 0, %s143
      %s144 = sphi 0, %s141
      %s145 = sphi 0, %s144
      %s161 = sphi 0, %s145
    $region4: #{_lambda_.1} parent=1 // loop_header_branch
      %16 = sbr.rel (%p14) target = $region8
    $region5: #{_lambda_.1} parent=1 // loop_body
      %s18 = ssub.s32 %s13, 1
      %s19 = ssub.s32 %s13, 2
      %s26 = sadd.s32 1, %s21
      %p27 = scmp.ge.s32.totalorder %s26, 1
      %s28 = scalar_select %p27, 0, %s26
      %s29 = sadd.s32 1, %s20
      %s30 = scalar_select %p27, %s29, %s20
      %p31 = scmp.ge.s32.totalorder %s30, 2
      %s32 = scalar_select %p31, 0, %s30
      %s33 = ssub.s32 %s21, %s28
      %p34 = scmp.eq.s32.totalorder %s33, 0
      %s36 = sadd.s32 %s35, 1
      %s37 = scalar_select %p34, %s35, %s36
      %p40 = pneg %p34
      %p41 = scmp.eq.s32.totalorder %s13, 1
      %p42 = por %p40, %p41
      %p43 = scmp.ne.s32.totalorder %s35, %s38
      %p44 = scmp.eq.s32.totalorder %s13, 0
      %p45 = por %p43, %p44
      %p46 = scmp.ne.s32.totalorder %s35, %s38
      %p47 = scmp.eq.s32.totalorder %s18, 1
      %p48 = por %p46, %p47
      %p49 = scmp.ne.s32.totalorder %s38, %s39
      %p50 = scmp.eq.s32.totalorder %s18, 0
      %p51 = por %p49, %p50
      %p52 = scmp.ne.s32.totalorder %s38, %s39
      %p53 = scmp.eq.s32.totalorder %s19, 1
      %p54 = por %p52, %p53
      %p56 = scmp.ne.s32.totalorder %s39, %s55
      %p57 = scmp.eq.s32.totalorder %s19, 0
      %p58 = por %p56, %p57
      %s59 = ssub.s32 %s21, %s28
      %p60 = scmp.eq.s32.totalorder %s59, 0
      %s62 = sadd.s32 %s61, 1
      %s63 = scalar_select %p60, %s61, %s62
      %p66 = pneg %p60
      %p67 = scmp.eq.s32.totalorder %s13, 1
      %p68 = por %p66, %p67
      %p69 = scmp.ne.s32.totalorder %s61, %s64
      %p70 = scmp.eq.s32.totalorder %s13, 0
      %p71 = por %p69, %p70
      %p72 = scmp.ne.s32.totalorder %s61, %s64
      %p73 = scmp.eq.s32.totalorder %s18, 1
      %p74 = por %p72, %p73
      %p75 = scmp.ne.s32.totalorder %s64, %s65
      %p76 = scmp.eq.s32.totalorder %s18, 0
      %p77 = por %p75, %p76
      %p78 = scmp.ne.s32.totalorder %s64, %s65
      %p79 = scmp.eq.s32.totalorder %s19, 1
      %p80 = por %p78, %p79
      %p82 = scmp.ne.s32.totalorder %s65, %s81
      %p83 = scmp.eq.s32.totalorder %s19, 0
      %p84 = por %p82, %p83
      %s85 = ssub.s32 %s20, %s32
      %p86 = scmp.eq.s32.totalorder %s85, 0
      %s88 = sadd.s32 %s87, 1
      %s89 = scalar_select %p86, %s87, %s88
      %p92 = pneg %p86
      %p93 = scmp.eq.s32.totalorder %s13, 1
      %p94 = por %p92, %p93
      %p95 = scmp.ne.s32.totalorder %s87, %s90
      %p96 = scmp.eq.s32.totalorder %s13, 0
      %p97 = por %p95, %p96
      %p98 = scmp.ne.s32.totalorder %s87, %s90
      %p99 = scmp.eq.s32.totalorder %s18, 1
      %p100 = por %p98, %p99
      %p101 = scmp.ne.s32.totalorder %s90, %s91
      %p102 = scmp.eq.s32.totalorder %s18, 0
      %p103 = por %p101, %p102
      %p104 = scmp.ne.s32.totalorder %s90, %s91
      %p105 = scmp.eq.s32.totalorder %s19, 1
      %p106 = por %p104, %p105
      %p108 = scmp.ne.s32.totalorder %s91, %s107
      %p109 = scmp.eq.s32.totalorder %s19, 0
      %p110 = por %p108, %p109
      %s111 = ssub.s32 %s20, %s32
      %p112 = scmp.eq.s32.totalorder %s111, 0
      %s114 = sadd.s32 %s113, 1
      %s115 = scalar_select %p112, %s113, %s114
      %p118 = pneg %p112
      %p119 = scmp.eq.s32.totalorder %s13, 1
      %p120 = por %p118, %p119
      %p121 = scmp.ne.s32.totalorder %s113, %s116
      %p122 = scmp.eq.s32.totalorder %s13, 0
      %p123 = por %p121, %p122
      %p124 = scmp.ne.s32.totalorder %s113, %s116
      %p125 = scmp.eq.s32.totalorder %s18, 1
      %p126 = por %p124, %p125
      %p127 = scmp.ne.s32.totalorder %s116, %s117
      %p128 = scmp.eq.s32.totalorder %s18, 0
      %p129 = por %p127, %p128
      %p130 = scmp.ne.s32.totalorder %s116, %s117
      %p131 = scmp.eq.s32.totalorder %s19, 1
      %p132 = por %p130, %p131
      %p134 = scmp.ne.s32.totalorder %s117, %s133
      %p135 = scmp.eq.s32.totalorder %s19, 0
      %p136 = por %p134, %p135
      %s137 = ssub.s32 %s21, %s28
      %s138 = ssub.s32 %s20, %s32
      %s139 = sor.u32 %s137, %s138
      %p140 = scmp.eq.s32.totalorder %s139, 0
      %s142 = sadd.s32 %s141, 1
      %s143 = scalar_select %p140, %s141, %s142
      %p146 = pneg %p140
      %p147 = scmp.eq.s32.totalorder %s13, 1
      %p148 = por %p146, %p147
      %p149 = scmp.ne.s32.totalorder %s141, %s144
      %p150 = scmp.eq.s32.totalorder %s13, 0
      %p151 = por %p149, %p150
      %p152 = scmp.ne.s32.totalorder %s141, %s144
      %p153 = scmp.eq.s32.totalorder %s18, 1
      %p154 = por %p152, %p153
      %p155 = scmp.ne.s32.totalorder %s144, %s145
      %p156 = scmp.eq.s32.totalorder %s18, 0
      %p157 = por %p155, %p156
      %p158 = scmp.ne.s32.totalorder %s144, %s145
      %p159 = scmp.eq.s32.totalorder %s19, 1
      %p160 = por %p158, %p159
      %p162 = scmp.ne.s32.totalorder %s145, %s161
      %p163 = scmp.eq.s32.totalorder %s19, 0
      %p164 = por %p162, %p163
      %p165 = scmp.le.s32.totalorder 1, %s13
      %p166 = scmp.lt.s32.totalorder %s13, 3
      %p167 = pnand %p165, %p166
      %p168 = pneg %p167
      // Predicated region
      $region9: #{_lambda_.1} parent=5 // pred_check
        _
      $region10: #{_lambda_.1} parent=5 // pred_check_branch
        %170 = sbr.rel (%p167) target = $region12
      $region11: #{_lambda_.1} parent=5 // pred_region
        %s171 = ssub.s32 %s13, 1
        // Predicated region
        $region13: #{_lambda_.1} parent=11 // pred_check
          %p172 = pneg %p51
        $region14: #{_lambda_.1} parent=11 // pred_check_branch
          %174 = sbr.rel (%p172) target = $region16
        $region15: #{_lambda_.1} parent=11 // pred_region
          %p175 = scmp.lt.s32.totalorder %s23, 0
          %s176 = scalar_select %p175, %s23, 0
          %s177 = smul.addr %s176, 4
          %s178 = scalar_lea.vmem %s0, %s177
        $region16: #{_lambda_.1} parent=11 // pred_fallthru
          _
        // Predicated region
        $region17: #{_lambda_.1} parent=11 // pred_check
          %p179 = pneg %p77
        $region18: #{_lambda_.1} parent=11 // pred_check_branch
          %181 = sbr.rel (%p179) target = $region20
        $region19: #{_lambda_.1} parent=11 // pred_region
          %p182 = scmp.lt.s32.totalorder %s23, 0
          %s183 = scalar_select %p182, %s23, 0
          %s184 = smul.addr %s183, 8
          %s185 = scalar_lea.vmem %s1, %s184
        $region20: #{_lambda_.1} parent=11 // pred_fallthru
          _
      $region12: #{_lambda_.1} parent=5 // pred_fallthru
        _
      %p186 = scmp.lt.s32.totalorder %s13, 2
      // Predicated region
      $region21: #{_lambda_.1} parent=5 // pred_check
        %p187 = pneg %p186
      $region22: #{_lambda_.1} parent=5 // pred_check_branch
        %189 = sbr.rel (%p187) target = $region24
      $region23: #{_lambda_.1} parent=5 // pred_region
        // Predicated region
        $region25: #{_lambda_.1} parent=23 // pred_check
          %p190 = pneg %p97
        $region26: #{_lambda_.1} parent=23 // pred_check_branch
          %192 = sbr.rel (%p190) target = $region28
        $region27: #{_lambda_.1} parent=23 // pred_region
          %s193 = smul.u32 16, %s20
          %p194 = scmp.lt.s32.totalorder %s193, 31
          %s195 = scalar_select %p194, %s193, 31
          %s196 = smul.addr %s195, 4
          %s197 = scalar_lea.vmem %s2, %s196
          %s198 = smul.u32 16, %s20
        $region28: #{_lambda_.1} parent=23 // pred_fallthru
          _
        // Predicated region
        $region29: #{_lambda_.1} parent=23 // pred_check
          %p199 = pneg %p123
        $region30: #{_lambda_.1} parent=23 // pred_check_branch
          %201 = sbr.rel (%p199) target = $region32
        $region31: #{_lambda_.1} parent=23 // pred_region
          %p202 = scmp.lt.s32.totalorder %s20, 1
          %s203 = scalar_select %p202, %s20, 1
          %s204 = scalar_lea.vmem %s3, %s203
        $region32: #{_lambda_.1} parent=23 // pred_fallthru
          _
      $region24: #{_lambda_.1} parent=5 // pred_fallthru
        _
      %p205 = scmp.le.s32.totalorder 1, %s13
      %p206 = scmp.lt.s32.totalorder %s13, 3
      %p207 = pnand %p205, %p206
      %p208 = pneg %p207
      // Predicated region
      $region33: #{_lambda_.1} parent=5 // pred_check
        _
      $region34: #{_lambda_.1} parent=5 // pred_check_branch
        %210 = sbr.rel (%p207) target = $region36
      $region35: #{_lambda_.1} parent=5 // pred_region
        %s211 = ssub.s32 %s13, 1
        %p212 = scmp.lt.s32.totalorder %s23, 0
        %s213 = scalar_select %p212, %s23, 0
        %s214 = smul.addr %s213, 4
        %s215 = scalar_lea.vmem %s0, %s214
        %p216 = pneg %p51
        %p217 = pneg %p48
        %p218 = scmp.lt.s32.totalorder %s23, 0
        %s219 = scalar_select %p218, %s23, 0
        %s220 = smul.addr %s219, 8
        %s221 = scalar_lea.vmem %s1, %s220
        %p222 = pneg %p77
        %p223 = pneg %p74
        %s224 = smul.u32 16, %s22
        %p225 = scmp.lt.s32.totalorder %s224, 31
        %s226 = scalar_select %p225, %s224, 31
        %s227 = smul.addr %s226, 4
        %s228 = scalar_lea.vmem %s2, %s227
        %p229 = pneg %p103
        %p230 = pneg %p100
        %p231 = scmp.lt.s32.totalorder %s22, 1
        %s232 = scalar_select %p231, %s22, 1
        %s233 = scalar_lea.vmem %s3, %s232
        %p234 = pneg %p129
        %p235 = pneg %p126
        %p236 = pneg %p157
        %p237 = pneg %p154
        %s238 = sand.u32 %s144, 1
        %s239 = scalar_lea.sflag [#allocation3], %s238
        %s240 = sand.u32 %s144, 1
        %s241 = smul.addr %s240, 8
        %s242 = scalar_lea.vmem [#allocation2], %s241
        %p243 = scmp.lt.s32.totalorder %s23, 0
        %s244 = scalar_select %p243, %s23, 0
        %s245 = smul.addr %s244, 4
        %s246 = scalar_lea.vmem %s0, %s245
        %p247 = scmp.lt.s32.totalorder %s23, 0
        %s248 = scalar_select %p247, %s23, 0
        %s249 = smul.addr %s248, 8
        %s250 = scalar_lea.vmem %s1, %s249
        %s251 = smul.u32 16, %s22
        %p252 = scmp.lt.s32.totalorder %s251, 31
        %s253 = scalar_select %p252, %s251, 31
        %s254 = smul.addr %s253, 4
        %s255 = scalar_lea.vmem %s2, %s254
        %s256 = smul.u32 16, %s22
        %p257 = scmp.lt.s32.totalorder %s22, 1
        %s258 = scalar_select %p257, %s22, 1
        %s259 = scalar_lea.vmem %s3, %s258
        %v261 = vld [vmem:[%s246] sm:$0xf]
        %v262 = vld [vmem:[%s255] sm:$0xf]
        %v263 = vld [vmem:[%s255 + $0x4] sm:$0xf]
        %v264 = vld [vmem:[%s255 + $0x8] sm:$0xf]
        %v265 = vld [vmem:[%s255 + $0xc] sm:$0xf]
        %v266 = vld [vmem:[%s255 + $0x10] sm:$0xf]
        %v267 = vld [vmem:[%s255 + $0x14] sm:$0xf]
        %v268 = vld [vmem:[%s255 + $0x18] sm:$0xf]
        %v269 = vld [vmem:[%s255 + $0x1c] sm:$0xf]
        %v270 = vld [vmem:[%s255 + $0x20] sm:$0xf]
        %v271 = vld [vmem:[%s255 + $0x24] sm:$0xf]
        %v272 = vld [vmem:[%s255 + $0x28] sm:$0xf]
        %v273 = vld [vmem:[%s255 + $0x2c] sm:$0xf]
        %v274 = vld [vmem:[%s255 + $0x30] sm:$0xf]
        %v275 = vld [vmem:[%s255 + $0x34] sm:$0xf]
        %v276 = vld [vmem:[%s255 + $0x38] sm:$0xf]
        %v277 = vld [vmem:[%s255 + $0x3c] sm:$0xf]
        %v294 = vunpack.c.l.b16 %v262
        %v295 = vunpack.c.l.b16 %v263
        %v296 = vunpack.c.l.b16 %v264
        %v297 = vunpack.c.l.b16 %v265
        %v298 = vunpack.c.l.b16 %v266
        %v299 = vunpack.c.l.b16 %v267
        %v300 = vunpack.c.l.b16 %v268
        %v301 = vunpack.c.l.b16 %v269
        %v302 = vunpack.c.l.b16 %v270
        %v303 = vunpack.c.l.b16 %v271
        %v304 = vunpack.c.l.b16 %v272
        %v305 = vunpack.c.l.b16 %v273
        %v306 = vunpack.c.l.b16 %v274
        %v307 = vunpack.c.l.b16 %v275
        %v308 = vunpack.c.l.b16 %v276
        %v309 = vunpack.c.l.b16 %v277
        %v310 = vpack.c.b16 %v295, %v294
        %v311 = vpack.c.b16 %v297, %v296
        %v312 = vpack.c.b16 %v299, %v298
        %v313 = vpack.c.b16 %v301, %v300
        %v314 = vpack.c.b16 %v303, %v302
        %v315 = vpack.c.b16 %v305, %v304
        %v316 = vpack.c.b16 %v307, %v306
        %v317 = vpack.c.b16 %v309, %v308
        %vm318 = vcmask 523264
        %v320 = vsel %vm318, %v261, 0
        %v323 = vsel %vm318, %v310, 0
        %v326 = vsel %vm318, %v311, 0
        %v329 = vsel %vm318, %v312, 0
        %v332 = vsel %vm318, %v313, 0
        %v335 = vsel %vm318, %v314, 0
        %v338 = vsel %vm318, %v315, 0
        %v341 = vsel %vm318, %v316, 0
        %v344 = vsel %vm318, %v317, 0
        %346 = vmatprep.subr.bf16.mxu0 0
        %347 = vmatpush1.bf16.xpose.msra.mxu0 %v323
        %348 = vmatprep.subr.bf16.mxu0 0
        %349 = vmatpush1.bf16.xpose.msra.mxu0 %v326
        %350 = vmatprep.subr.bf16.mxu0 0
        %351 = vmatpush1.bf16.xpose.msra.mxu0 %v329
        %352 = vmatprep.subr.bf16.mxu0 0
        %353 = vmatpush1.bf16.xpose.msra.mxu0 %v332
        %354 = vmatprep.subr.bf16.mxu0 0
        %355 = vmatpush1.bf16.xpose.msra.mxu0 %v335
        %356 = vmatprep.subr.bf16.mxu0 0
        %357 = vmatpush1.bf16.xpose.msra.mxu0 %v338
        %358 = vmatprep.subr.bf16.mxu0 0
        %359 = vmatpush1.bf16.xpose.msra.mxu0 %v341
        %360 = vmatprep.subr.bf16.mxu0 0
        %361 = vmatpush1.bf16.xpose.msra.mxu0 %v344
        %362 = vmatprep.subr.bf16.mxu0 0
        %363 = vmatpush1.bf16.xpose.msra.mxu0 0
        %364 = vmatprep.subr.bf16.mxu0 0
        %365 = vmatpush1.bf16.xpose.msra.mxu0 0
        %366 = vmatprep.subr.bf16.mxu0 0
        %367 = vmatpush1.bf16.xpose.msra.mxu0 0
        %368 = vmatprep.subr.bf16.mxu0 0
        %369 = vmatpush1.bf16.xpose.msra.mxu0 0
        %370 = vmatprep.subr.bf16.mxu0 0
        %371 = vmatpush1.bf16.xpose.msra.mxu0 0
        %372 = vmatprep.subr.bf16.mxu0 0
        %373 = vmatpush1.bf16.xpose.msra.mxu0 0
        %374 = vmatprep.subr.bf16.mxu0 0
        %375 = vmatpush1.bf16.xpose.msra.mxu0 0
        %376 = vmatprep.subr.bf16.mxu0 0
        %377 = vmatpush1.bf16.xpose.msra.mxu0 0
        %378 = vmatprep.mubr.bf16.mxu0 0
        %379 = vmatmul.mubr.bf16.gmra.mrb[0].mxu0 %v320
        %v380 = vpop.f32.mrb[0].mxu0
        %v381 = vadd.f32 0.0, %v380
        %v382 = vpop.f32.mrb[0].mxu0
        %v383 = vpop.f32.mrb[0].mxu0
        %v384 = vpop.f32.mrb[0].mxu0
        %385 = vdwg.mxu0
        %v386 = vld [vmem:[%s259] sm:$0x1]
        %v388 = vlaneseq
        %v389 = vshrl.u32 %v388, 7
        %v390 = vsub.s32 0, %v389
        %v391 = vrot.slane %v386, %v390
        %v393 = vmul.f32 %v381, %v391
        %v394 = vmax.f32 %v393, -1.0
        %v395 = vmin.f32 %v394, 1.0
        %v396 = vld [vmem:[%s250] sm:$0xff]
        %398 = vset.pattern.permute.xlu0 0
        %399 = vperm.xlu0 %398, %v396
        %v400 = vpop.permute.xlu0 %399
        %v402 = vmul.f32 %v395, %v400
        %403 = vst [vmem:[%s242] sm:$0xff] %v402
        %s404 = sand.u32 %s144, 1
        %s405 = scalar_lea.sflag [#allocation3], %s404
        %s406 = sand.u32 %s144, 1
        %s407 = smul.addr %s406, 8
        %s408 = scalar_lea.vmem [#allocation2], %s407
        // Predicated region
        $region37: #{_lambda_.1} parent=35 // pred_check
          %p409 = pneg %p154
        $region38: #{_lambda_.1} parent=35 // pred_check_branch
          %411 = sbr.rel (%p409) target = $region40
        $region39: #{_lambda_.1} parent=35 // pred_region
          %s413 = ssub.s32 128, 128
          %414 = vsyncadd %s405, %s413
          %s415 = smul.addr %s23, 2
          %s416 = sadd.s32 %s22, %s415
          %s417 = smul.addr %s416, 128
          %s418 = scalar_lea.hbm %s4, %s417
          %s420 = sshll.u32 %s408, 4
          %s421 = int_to_ptr.vmem [resolvable:$true] %s420
          %423 = dma.vmem_to_hbm [thread:$0]  %s421, 128, %s418, %s405
        $region40: #{_lambda_.1} parent=35 // pred_fallthru
          _
      $region36: #{_lambda_.1} parent=5 // pred_fallthru
        _
      %p424 = scmp.le.s32.totalorder 2, %s13
      // Predicated region
      $region41: #{_lambda_.1} parent=5 // pred_check
        %p425 = pneg %p424
      $region42: #{_lambda_.1} parent=5 // pred_check_branch
        %427 = sbr.rel (%p425) target = $region44
      $region43: #{_lambda_.1} parent=5 // pred_region
        %s428 = ssub.s32 %s13, 2
        // Predicated region
        $region45: #{_lambda_.1} parent=43 // pred_check
          %p429 = pneg %p160
        $region46: #{_lambda_.1} parent=43 // pred_check_branch
          %431 = sbr.rel (%p429) target = $region48
        $region47: #{_lambda_.1} parent=43 // pred_region
          %s432 = sand.u32 %s145, 1
          %s433 = scalar_lea.sflag [#allocation3], %s432
          %s434 = sand.u32 %s145, 1
          %s435 = smul.addr %s434, 8
          %s436 = scalar_lea.vmem [#allocation2], %s435
          %437 = dma.done %s433, 128
        $region48: #{_lambda_.1} parent=43 // pred_fallthru
          _
      $region44: #{_lambda_.1} parent=5 // pred_fallthru
        _
    $region6: #{_lambda_.1} parent=1 // loop_footer
      %s17 = sadd.s32 1, %s13
    $region7: #{_lambda_.1} parent=1 // loop_footer_branch
      %12 = sbr.rel target = $region3
    $region8: #{_lambda_.1} parent=1 // loop_exit
      _
    %438 = vsyncpa [#allocation3], 1
    %s439 = scalar_lea.sflag [#allocation3], 1
    %440 = vsyncpa %s439, 1

</llo_original>
